<compile_context>
chip_gen: v5e
topology: v5e:2x2
jax: 0.10.0
libtpu: 0.0.40
codegen_flags: <defaults>
</compile_context>

<pallas_src>
from functools import partial

import jax
import jax.numpy as jnp
from jax.experimental import pallas as pl
from jax.experimental.pallas import tpu as pltpu


def _round_up(n, m):
    return ((n + m - 1) // m) * m


# ----------------------------- Pallas kernel ------------------------------ #
def _agent_fwd_kernel(x_ref, win_ref, b1_ref, wh_ref, bh_ref, out_ref):
    # Single fused projection: (tile_m, K_pad) @ (K_pad, hidden) -> f32 acc.
    h = jnp.dot(x_ref[...], win_ref[...], preferred_element_type=jnp.float32)
    h = jnp.maximum(h + b1_ref[...], 0.0)                 # f32 bias + ReLU (VPU)
    # Fused heads: one lane-dense (tile_m, 128) store (no masked vst.msk).
    out_ref[...] = (
        jnp.dot(h.astype(wh_ref.dtype), wh_ref[...],
                preferred_element_type=jnp.float32)
        + bh_ref[...])


def agent_forward_pallas(x, w_in, b1, w_heads, b_heads):
    """x: (B_pad, K_pad) bf16; returns (B_pad, N_heads) f32."""
    b_pad, k_pad = x.shape
    hidden = w_in.shape[1]
    n_heads = w_heads.shape[1]
    tile_m = min(b_pad, 512)          # wrapper guarantees b_pad % tile_m == 0
    assert b_pad % tile_m == 0
    grid = (b_pad // tile_m,)

    return pl.pallas_call(
        _agent_fwd_kernel,
        out_shape=jax.ShapeDtypeStruct((b_pad, n_heads), jnp.float32),
        grid=grid,
        in_specs=[
            pl.BlockSpec((tile_m, k_pad), lambda m: (m, 0)),   # activations
            pl.BlockSpec((k_pad, hidden), lambda m: (0, 0)),   # fused W_in
            pl.BlockSpec((1, hidden), lambda m: (0, 0)),       # b1
            pl.BlockSpec((hidden, n_heads), lambda m: (0, 0)), # fused W_heads
            pl.BlockSpec((1, n_heads), lambda m: (0, 0)),      # fused b_heads
        ],
        out_specs=pl.BlockSpec((tile_m, n_heads), lambda m: (m, 0)),
        compiler_params=pltpu.CompilerParams(
            dimension_semantics=("parallel",)),
    )(x, w_in, b1, w_heads, b_heads)


# ------------------- jitted end-to-end forward (glue + kernel) ------------- #
@partial(jax.jit, static_argnames=("act_dim", "pred_dim"))
def _agent_forward(obs, texts, states, embed, w_in, b1, w_heads, b_heads,
                   *, act_dim, pred_dim):
    B = obs.shape[0]
    k_pad = w_in.shape[0]
    # Glue: flatten NCHW image, embedding lookup + mean-pool over tokens.
    obs_flat = obs.reshape(B, -1).astype(jnp.float32)
    txt_feat = jnp.mean(embed[texts], axis=1)                       # [B, E]
    x = jnp.concatenate(
        [obs_flat, txt_feat, states.astype(jnp.float32)], axis=1)
    k_in = x.shape[1]
    # Pad rows to the kernel's row tile and features to K_pad (bf16 operands).
    tile_m = min(_round_up(B, 8), 512)
    b_pad = _round_up(B, tile_m)
    x = jnp.pad(x, ((0, b_pad - B), (0, k_pad - k_in))).astype(jnp.bfloat16)

    out = agent_forward_pallas(x, w_in, b1, w_heads, b_heads)
    actions = out[:B, :act_dim]
    prediction = out[:B, act_dim:act_dim + pred_dim]
    return actions, prediction


# --------------------------- Agent wrapper (glue) -------------------------- #
class Agent:
    """JAX/Pallas port of Agent.forward: (obs, texts, states) -> (actions, prediction)."""

    def __init__(self, params, loss_weight=(1.0, 1.0), use_origin_img=False):
        self.params = params
        self.loss_weight = loss_weight
        self.use_origin_img = use_origin_img

        # ---- one-time fused / padded weight prep (matmul operands in bf16) ---
        wo, wt, ws = params["wo"], params["wt"], params["ws"]
        w_in = jnp.concatenate([wo, wt, ws], axis=0)           # (K, hidden)
        self._k_in = w_in.shape[0]
        self._k_pad = _round_up(self._k_in, 128)
        w_in = jnp.pad(w_in, ((0, self._k_pad - self._k_in), (0, 0)))
        self.w_in = w_in.astype(jnp.bfloat16)
        self.b1 = params["b1"].astype(jnp.float32)

        wa, wp = params["wa"], params["wp"]
        self.act_dim = wa.shape[1]
        self.pred_dim = wp.shape[1]
        w_heads = jnp.concatenate([wa, wp], axis=1)            # (hidden, 7+64)
        n_heads = _round_up(w_heads.shape[1], 128)
        w_heads = jnp.pad(w_heads, ((0, 0), (0, n_heads - w_heads.shape[1])))
        self.w_heads = w_heads.astype(jnp.bfloat16)            # zero-padded lanes
        b_heads = jnp.concatenate([params["ba"], params["bp"]], axis=1)
        self.b_heads = jnp.pad(
            b_heads, ((0, 0), (0, n_heads - b_heads.shape[1]))).astype(jnp.float32)
        self.embed = params["embed"].astype(jnp.float32)

    def __repr__(self):
        return "agent"

    def forward(self, obs, texts, states):
        return _agent_forward(obs, texts, states, self.embed, self.w_in,
                              self.b1, self.w_heads, self.b_heads,
                              act_dim=self.act_dim, pred_dim=self.pred_dim)

    def act(self, batch, should_sample=True, temperature=1.0):
        actions, _ = self.forward(batch["observations"], batch["instr"],
                                  batch["states"])
        return actions

    # TODO(synk): compute_loss / load / update_target_tokenizer are training /
    # checkpoint utilities (torch.load, EMA, F.mse_loss on batches) and are
    # intentionally not part of the forward kernel.


# ------------------------------- Param init -------------------------------- #
def init_params(key, *, c=4, h=16, w=16, seq=8, vocab=32, embed=32,
                state_dim=8, hidden=128, act_dim=7, pred_dim=64):
    ks = jax.random.split(key, 10)
    s = lambda k, shape, scale: (scale * jax.random.normal(k, shape)).astype(jnp.float32)
    din_img = c * h * w
    return {
        "embed": s(ks[0], (vocab, embed), 0.1),
        "wo": s(ks[1], (din_img, hidden), 0.02),
        "wt": s(ks[2], (embed, hidden), 0.1),
        "ws": s(ks[3], (state_dim, hidden), 0.1),
        "b1": s(ks[4], (1, hidden), 0.01),
        "wa": s(ks[5], (hidden, act_dim), 0.05),
        "ba": s(ks[6], (1, act_dim), 0.01),
        "wp": s(ks[7], (hidden, pred_dim), 0.05),
        "bp": s(ks[8], (1, pred_dim), 0.01),
    }


def _reference_forward(obs, texts, states, p):
    B = obs.shape[0]
    obs_flat = obs.reshape(B, -1).astype(jnp.float32)
    txt_feat = jnp.mean(p["embed"][texts], axis=1)
    h = jnp.maximum(obs_flat @ p["wo"] + txt_feat @ p["wt"]
                    + states.astype(jnp.float32) @ p["ws"] + p["b1"], 0.0)
    return h @ p["wa"] + p["ba"], h @ p["wp"] + p["bp"]


# ---------------------------------- main ----------------------------------- #
if __name__ == "__main__":
    key = jax.random.PRNGKey(0)
    k_obs, k_txt, k_st, k_par = jax.random.split(key, 4)

    B, C, H, W = 2, 4, 16, 16
    SEQ, VOCAB, STATE_DIM = 8, 32, 8

    obs = jax.random.normal(k_obs, (B, C, H, W), dtype=jnp.float32)   # NCHW
    texts = jax.random.randint(k_txt, (B, SEQ), 0, VOCAB)             # token ids
    states = jax.random.normal(k_st, (B, STATE_DIM), dtype=jnp.float32)

    params = init_params(k_par, c=C, h=H, w=W, seq=SEQ, vocab=VOCAB,
                         state_dim=STATE_DIM)

    agent = Agent(params, loss_weight=(1.0, 1.0))
    actions, prediction = agent.forward(obs, texts, states)
    jax.block_until_ready((actions, prediction))

    ref_a, ref_p = _reference_forward(obs, texts, states, params)
    # bf16 matmul operands (f32 accumulation) -> relaxed tolerance vs f32 ref.
    assert jnp.allclose(actions, ref_a, atol=3e-2, rtol=3e-2)
    assert jnp.allclose(prediction, ref_p, atol=3e-2, rtol=3e-2)
    assert actions.shape == (B, 7) and prediction.shape == (B, 64)

    print("KERNEL_OK")
</pallas_src>

<mosaic_0001>
module attributes {stable_mosaic.version = 11 : i64} {
  func.func @_agent_fwd_kernel(%arg0: i32, %arg1: memref<8x1152xbf16, #tpu.memory_space<vmem>>, %arg2: memref<1152x128xbf16, #tpu.memory_space<vmem>>, %arg3: memref<1x128xf32, #tpu.memory_space<vmem>>, %arg4: memref<128x128xbf16, #tpu.memory_space<vmem>>, %arg5: memref<1x128xf32, #tpu.memory_space<vmem>>, %arg6: memref<8x128xf32, #tpu.memory_space<vmem>>) attributes {dimension_semantics = [#tpu.dimension_semantics<parallel>], iteration_bounds = array<i64: 1>, scalar_prefetch = 0 : i64, scratch_operands = 0 : i64, tpu.core_type = #tpu.core_type<tc>, window_params = [{transform_indices = @transform_0, window_bounds = array<i64: 8, 1152>}, {pipeline_mode = #tpu.pipeline_mode<synchronous>, transform_indices = @transform_1, window_bounds = array<i64: 1152, 128>}, {pipeline_mode = #tpu.pipeline_mode<synchronous>, transform_indices = @transform_2, window_bounds = array<i64: 1, 128>}, {pipeline_mode = #tpu.pipeline_mode<synchronous>, transform_indices = @transform_3, window_bounds = array<i64: 128, 128>}, {pipeline_mode = #tpu.pipeline_mode<synchronous>, transform_indices = @transform_4, window_bounds = array<i64: 1, 128>}, {transform_indices = @transform_5, window_bounds = array<i64: 8, 128>}]} {
    %c0 = arith.constant 0 : index
    %c0_0 = arith.constant 0 : index
    %0 = vector.load %arg1[%c0, %c0_0] : memref<8x1152xbf16, #tpu.memory_space<vmem>>, vector<8x1152xbf16>
    %c0_1 = arith.constant 0 : index
    %c0_2 = arith.constant 0 : index
    %1 = vector.load %arg2[%c0_1, %c0_2] : memref<1152x128xbf16, #tpu.memory_space<vmem>>, vector<1152x128xbf16>
    %cst = arith.constant dense<0.000000e+00> : vector<8x128xf32>
    %2 = tpu.matmul %0, %1, %cst {dimension_numbers = #tpu.dot_dimension_numbers<[1], [0], [0], [1], [0, 0, 1, 1], [], []>} : vector<8x1152xbf16>, vector<1152x128xbf16>, vector<8x128xf32> -> vector<8x128xf32>
    %c0_3 = arith.constant 0 : index
    %c0_4 = arith.constant 0 : index
    %3 = vector.load %arg3[%c0_3, %c0_4] : memref<1x128xf32, #tpu.memory_space<vmem>>, vector<1x128xf32>
    %4 = vector.broadcast %3 : vector<1x128xf32> to vector<8x128xf32>
    %5 = arith.addf %2, %4 : vector<8x128xf32>
    %cst_5 = arith.constant 0.000000e+00 : f32
    %6 = vector.broadcast %cst_5 : f32 to vector<8x128xf32>
    %7 = arith.maximumf %5, %6 : vector<8x128xf32>
    %8 = arith.truncf %7 : vector<8x128xf32> to vector<8x128xbf16>
    %c0_6 = arith.constant 0 : index
    %c0_7 = arith.constant 0 : index
    %9 = vector.load %arg4[%c0_6, %c0_7] : memref<128x128xbf16, #tpu.memory_space<vmem>>, vector<128x128xbf16>
    %cst_8 = arith.constant dense<0.000000e+00> : vector<8x128xf32>
    %10 = tpu.matmul %8, %9, %cst_8 {dimension_numbers = #tpu.dot_dimension_numbers<[1], [0], [0], [1], [0, 0, 1, 1], [], []>} : vector<8x128xbf16>, vector<128x128xbf16>, vector<8x128xf32> -> vector<8x128xf32>
    %c0_9 = arith.constant 0 : index
    %c0_10 = arith.constant 0 : index
    %11 = vector.load %arg5[%c0_9, %c0_10] : memref<1x128xf32, #tpu.memory_space<vmem>>, vector<1x128xf32>
    %12 = vector.broadcast %11 : vector<1x128xf32> to vector<8x128xf32>
    %13 = arith.addf %10, %12 : vector<8x128xf32>
    %c0_11 = arith.constant 0 : index
    %c0_12 = arith.constant 0 : index
    %14 = vector.load %arg6[%c0_11, %c0_12] : memref<8x128xf32, #tpu.memory_space<vmem>>, vector<8x128xf32>
    tpu.vector_store %arg6[%c0_11, %c0_12], %13 {strides = array<i32>} : memref<8x128xf32, #tpu.memory_space<vmem>>, vector<8x128xf32>,
    return
  }
  func.func @transform_0(%arg0: i32) -> (i32, i32) {
    %c0_i32 = arith.constant 0 : i32
    %c0_i32_0 = arith.constant 0 : i32
    return %arg0, %c0_i32 : i32, i32
  }
  func.func @transform_1(%arg0: i32) -> (i32, i32) {
    %c0_i32 = arith.constant 0 : i32
    %c0_i32_0 = arith.constant 0 : i32
    %c0_i32_1 = arith.constant 0 : i32
    return %c0_i32, %c0_i32_0 : i32, i32
  }
  func.func @transform_2(%arg0: i32) -> (i32, i32) {
    %c0_i32 = arith.constant 0 : i32
    %c0_i32_0 = arith.constant 0 : i32
    %c0_i32_1 = arith.constant 0 : i32
    return %c0_i32, %c0_i32_0 : i32, i32
  }
  func.func @transform_3(%arg0: i32) -> (i32, i32) {
    %c0_i32 = arith.constant 0 : i32
    %c0_i32_0 = arith.constant 0 : i32
    %c0_i32_1 = arith.constant 0 : i32
    return %c0_i32, %c0_i32_0 : i32, i32
  }
  func.func @transform_4(%arg0: i32) -> (i32, i32) {
    %c0_i32 = arith.constant 0 : i32
    %c0_i32_0 = arith.constant 0 : i32
    %c0_i32_1 = arith.constant 0 : i32
    return %c0_i32, %c0_i32_0 : i32, i32
  }
  func.func @transform_5(%arg0: i32) -> (i32, i32) {
    %c0_i32 = arith.constant 0 : i32
    %c0_i32_0 = arith.constant 0 : i32
    return %arg0, %c0_i32 : i32, i32
  }
}

</mosaic_0001>

<llo_original>
// kernel: _agent_forward.1
$region0: #{_agent_forward.1}
  #allocation0 [shape = 'u32[]', space=smem, size = 0x4, offset = 0x4, fixed_abs, tag = 'smem constant byte address 0x4 - core index']
  #allocation1 [shape = 'u32[72,128]{1,0:T(1,128)}', space=vmem, size = 0x9000, scoped, tag = 'internal scratch']
  %s0 = inlined_call_operand.vmem [shape: bf16[8,1152], index: 0, kind: input, shape index: {}]
  %s1 = inlined_call_operand.hbm [shape: bf16[1152,128], index: 1, kind: input, shape index: {}]
  %s2 = inlined_call_operand.vmem [shape: f32[1,128], index: 2, kind: input, shape index: {}]
  %s3 = inlined_call_operand.vmem [shape: bf16[128,128], index: 3, kind: input, shape index: {}]
  %s4 = inlined_call_operand.vmem [shape: f32[1,128], index: 4, kind: input, shape index: {}]
  %s5 = inlined_call_operand.vmem [shape: f32[8,128], index: 5, kind: output, shape index: {}]
  %s6 = sld [smem:[#allocation0]]
  $region34: #{_agent_forward.1} parent=0
    _
  %s8 = ssub.s32 1, %s6
  %s9 = scalar_select 0, %s8, %s6
  $region1: #{_agent_forward.1} parent=0
    #allocation2 [shape = 'u8[294912]{0}', space=vmem, size = 0x48000, scoped, tag = 'input window, operand 1, single buffered']
    #allocation3 [shape = 's32[1]{0}', space=sflag, size = 0x4, scoped, tag = 'scoped memory for _agent_forward.1']
    %10 = vsyncpa [#allocation3], 0
    // Predicated region
    $region2: #{_agent_forward.1} parent=1 // pred_check
      _
    $region3: #{_agent_forward.1} parent=1 // pred_check_branch
      %12 = sbr.rel (0) target = $region5
    $region4: #{_agent_forward.1} parent=1 // pred_region
      _
    $region5: #{_agent_forward.1} parent=1 // pred_fallthru
      _
    // Predicated region
    $region6: #{_agent_forward.1} parent=1 // pred_check
      _
    $region7: #{_agent_forward.1} parent=1 // pred_check_branch
      %14 = sbr.rel (0) target = $region9
    $region8: #{_agent_forward.1} parent=1 // pred_region
      %16 = vsyncadd [#allocation3], 0
      %s17 = sshll.u32 %s1, 4
      %s18 = int_to_ptr.hbm [resolvable:$true] %s17
      %s19 = sshll.u32 [#allocation2], 4
      %s20 = int_to_ptr.vmem [resolvable:$true] %s19
      %25 = dma.hbm_to_vmem [thread:$0]  %s18, 9216, %s20, [#allocation3], 64, 64, 4
    $region9: #{_agent_forward.1} parent=1 // pred_fallthru
      _
    // Predicated region
    $region10: #{_agent_forward.1} parent=1 // pred_check
      _
    $region11: #{_agent_forward.1} parent=1 // pred_check_branch
      %27 = sbr.rel (0) target = $region13
    $region12: #{_agent_forward.1} parent=1 // pred_region
      _
    $region13: #{_agent_forward.1} parent=1 // pred_fallthru
      _
    // Predicated region
    $region14: #{_agent_forward.1} parent=1 // pred_check
      _
    $region15: #{_agent_forward.1} parent=1 // pred_check_branch
      %29 = sbr.rel (0) target = $region17
    $region16: #{_agent_forward.1} parent=1 // pred_region
      _
    $region17: #{_agent_forward.1} parent=1 // pred_fallthru
      _
    // Predicated region
    $region18: #{_agent_forward.1} parent=1 // pred_check
      _
    $region19: #{_agent_forward.1} parent=1 // pred_check_branch
      %31 = sbr.rel (0) target = $region21
    $region20: #{_agent_forward.1} parent=1 // pred_region
      _
    $region21: #{_agent_forward.1} parent=1 // pred_fallthru
      _
    // Predicated region
    $region22: #{_agent_forward.1} parent=1 // pred_check
      _
    $region23: #{_agent_forward.1} parent=1 // pred_check_branch
      %33 = sbr.rel (0) target = $region25
    $region24: #{_agent_forward.1} parent=1 // pred_region
      %35 = dma.done [#allocation3], 9216
    $region25: #{_agent_forward.1} parent=1 // pred_fallthru
      _
    %v36 = vld [vmem:[%s0] sm:$0xff]
    %v37 = vld [vmem:[%s0 + $0x8] sm:$0xff]
    %v38 = vld [vmem:[%s0 + $0x10] sm:$0xff]
    %v39 = vld [vmem:[%s0 + $0x18] sm:$0xff]
    %v40 = vld [vmem:[%s0 + $0x20] sm:$0xf]
    %v41 = vld [vmem:[#allocation2] sm:$0xf]
    %v42 = vld [vmem:[#allocation2 + $0x4] sm:$0xf]
    %v43 = vld [vmem:[#allocation2 + $0x8] sm:$0xf]
    %v44 = vld [vmem:[#allocation2 + $0xc] sm:$0xf]
    %v45 = vld [vmem:[#allocation2 + $0x10] sm:$0xf]
    %v46 = vld [vmem:[#allocation2 + $0x14] sm:$0xf]
    %v47 = vld [vmem:[#allocation2 + $0x18] sm:$0xf]
    %v48 = vld [vmem:[#allocation2 + $0x1c] sm:$0xf]
    %v49 = vld [vmem:[#allocation2 + $0x20] sm:$0xf]
    %v50 = vld [vmem:[#allocation2 + $0x24] sm:$0xf]
    %v51 = vld [vmem:[#allocation2 + $0x28] sm:$0xf]
    %v52 = vld [vmem:[#allocation2 + $0x2c] sm:$0xf]
    %v53 = vld [vmem:[#allocation2 + $0x30] sm:$0xf]
    %v54 = vld [vmem:[#allocation2 + $0x34] sm:$0xf]
    %v55 = vld [vmem:[#allocation2 + $0x38] sm:$0xf]
    %v56 = vld [vmem:[#allocation2 + $0x3c] sm:$0xf]
    %v57 = vld [vmem:[#allocation2 + $0x40] sm:$0xf]
    %v58 = vld [vmem:[#allocation2 + $0x44] sm:$0xf]
    %v59 = vld [vmem:[#allocation2 + $0x48] sm:$0xf]
    %v60 = vld [vmem:[#allocation2 + $0x4c] sm:$0xf]
    %v61 = vld [vmem:[#allocation2 + $0x50] sm:$0xf]
    %v62 = vld [vmem:[#allocation2 + $0x54] sm:$0xf]
    %v63 = vld [vmem:[#allocation2 + $0x58] sm:$0xf]
    %v64 = vld [vmem:[#allocation2 + $0x5c] sm:$0xf]
    %v65 = vld [vmem:[#allocation2 + $0x60] sm:$0xf]
    %v66 = vld [vmem:[#allocation2 + $0x64] sm:$0xf]
    %v67 = vld [vmem:[#allocation2 + $0x68] sm:$0xf]
    %v68 = vld [vmem:[#allocation2 + $0x6c] sm:$0xf]
    %v69 = vld [vmem:[#allocation2 + $0x70] sm:$0xf]
    %v70 = vld [vmem:[#allocation2 + $0x74] sm:$0xf]
    %v71 = vld [vmem:[#allocation2 + $0x78] sm:$0xf]
    %v72 = vld [vmem:[#allocation2 + $0x7c] sm:$0xf]
    %v73 = vld [vmem:[#allocation2 + $0x80] sm:$0xf]
    %v74 = vld [vmem:[#allocation2 + $0x84] sm:$0xf]
    %v75 = vld [vmem:[#allocation2 + $0x88] sm:$0xf]
    %v76 = vld [vmem:[#allocation2 + $0x8c] sm:$0xf]
    %v77 = vld [vmem:[#allocation2 + $0x90] sm:$0xf]
    %v78 = vld [vmem:[#allocation2 + $0x94] sm:$0xf]
    %v79 = vld [vmem:[#allocation2 + $0x98] sm:$0xf]
    %v80 = vld [vmem:[#allocation2 + $0x9c] sm:$0xf]
    %v81 = vld [vmem:[#allocation2 + $0xa0] sm:$0xf]
    %v82 = vld [vmem:[#allocation2 + $0xa4] sm:$0xf]
    %v83 = vld [vmem:[#allocation2 + $0xa8] sm:$0xf]
    %v84 = vld [vmem:[#allocation2 + $0xac] sm:$0xf]
    %v85 = vld [vmem:[#allocation2 + $0xb0] sm:$0xf]
    %v86 = vld [vmem:[#allocation2 + $0xb4] sm:$0xf]
    %v87 = vld [vmem:[#allocation2 + $0xb8] sm:$0xf]
    %v88 = vld [vmem:[#allocation2 + $0xbc] sm:$0xf]
    %v89 = vld [vmem:[#allocation2 + $0xc0] sm:$0xf]
    %v90 = vld [vmem:[#allocation2 + $0xc4] sm:$0xf]
    %v91 = vld [vmem:[#allocation2 + $0xc8] sm:$0xf]
    %v92 = vld [vmem:[#allocation2 + $0xcc] sm:$0xf]
    %v93 = vld [vmem:[#allocation2 + $0xd0] sm:$0xf]
    %v94 = vld [vmem:[#allocation2 + $0xd4] sm:$0xf]
    %v95 = vld [vmem:[#allocation2 + $0xd8] sm:$0xf]
    %v96 = vld [vmem:[#allocation2 + $0xdc] sm:$0xf]
    %v97 = vld [vmem:[#allocation2 + $0xe0] sm:$0xf]
    %v98 = vld [vmem:[#allocation2 + $0xe4] sm:$0xf]
    %v99 = vld [vmem:[#allocation2 + $0xe8] sm:$0xf]
    %v100 = vld [vmem:[#allocation2 + $0xec] sm:$0xf]
    %v101 = vld [vmem:[#allocation2 + $0xf0] sm:$0xf]
    %v102 = vld [vmem:[#allocation2 + $0xf4] sm:$0xf]
    %v103 = vld [vmem:[#allocation2 + $0xf8] sm:$0xf]
    %v104 = vld [vmem:[#allocation2 + $0xfc] sm:$0xf]
    %v105 = vld [vmem:[#allocation2 + $0x100] sm:$0xf]
    %v106 = vld [vmem:[#allocation2 + $0x104] sm:$0xf]
    %v107 = vld [vmem:[#allocation2 + $0x108] sm:$0xf]
    %v108 = vld [vmem:[#allocation2 + $0x10c] sm:$0xf]
    %v109 = vld [vmem:[#allocation2 + $0x110] sm:$0xf]
    %v110 = vld [vmem:[#allocation2 + $0x114] sm:$0xf]
    %v111 = vld [vmem:[#allocation2 + $0x118] sm:$0xf]
    %v112 = vld [vmem:[#allocation2 + $0x11c] sm:$0xf]
    %v113 = vld [vmem:[#allocation2 + $0x120] sm:$0xf]
    %v114 = vld [vmem:[#allocation2 + $0x124] sm:$0xf]
    %v115 = vld [vmem:[#allocation2 + $0x128] sm:$0xf]
    %v116 = vld [vmem:[#allocation2 + $0x12c] sm:$0xf]
    %v117 = vld [vmem:[#allocation2 + $0x130] sm:$0xf]
    %v118 = vld [vmem:[#allocation2 + $0x134] sm:$0xf]
    %v119 = vld [vmem:[#allocation2 + $0x138] sm:$0xf]
    %v120 = vld [vmem:[#allocation2 + $0x13c] sm:$0xf]
    %v121 = vld [vmem:[#allocation2 + $0x140] sm:$0xf]
    %v122 = vld [vmem:[#allocation2 + $0x144] sm:$0xf]
    %v123 = vld [vmem:[#allocation2 + $0x148] sm:$0xf]
    %v124 = vld [vmem:[#allocation2 + $0x14c] sm:$0xf]
    %v125 = vld [vmem:[#allocation2 + $0x150] sm:$0xf]
    %v126 = vld [vmem:[#allocation2 + $0x154] sm:$0xf]
    %v127 = vld [vmem:[#allocation2 + $0x158] sm:$0xf]
    %v128 = vld [vmem:[#allocation2 + $0x15c] sm:$0xf]
    %v129 = vld [vmem:[#allocation2 + $0x160] sm:$0xf]
    %v130 = vld [vmem:[#allocation2 + $0x164] sm:$0xf]
    %v131 = vld [vmem:[#allocation2 + $0x168] sm:$0xf]
    %v132 = vld [vmem:[#allocation2 + $0x16c] sm:$0xf]
    %v133 = vld [vmem:[#allocation2 + $0x170] sm:$0xf]
    %v134 = vld [vmem:[#allocation2 + $0x174] sm:$0xf]
    %v135 = vld [vmem:[#allocation2 + $0x178] sm:$0xf]
    %v136 = vld [vmem:[#allocation2 + $0x17c] sm:$0xf]
    %v137 = vld [vmem:[#allocation2 + $0x180] sm:$0xf]
    %v138 = vld [vmem:[#allocation2 + $0x184] sm:$0xf]
    %v139 = vld [vmem:[#allocation2 + $0x188] sm:$0xf]
    %v140 = vld [vmem:[#allocation2 + $0x18c] sm:$0xf]
    %v141 = vld [vmem:[#allocation2 + $0x190] sm:$0xf]
    %v142 = vld [vmem:[#allocation2 + $0x194] sm:$0xf]
    %v143 = vld [vmem:[#allocation2 + $0x198] sm:$0xf]
    %v144 = vld [vmem:[#allocation2 + $0x19c] sm:$0xf]
    %v145 = vld [vmem:[#allocation2 + $0x1a0] sm:$0xf]
    %v146 = vld [vmem:[#allocation2 + $0x1a4] sm:$0xf]
    %v147 = vld [vmem:[#allocation2 + $0x1a8] sm:$0xf]
    %v148 = vld [vmem:[#allocation2 + $0x1ac] sm:$0xf]
    %v149 = vld [vmem:[#allocation2 + $0x1b0] sm:$0xf]
    %v150 = vld [vmem:[#allocation2 + $0x1b4] sm:$0xf]
    %v151 = vld [vmem:[#allocation2 + $0x1b8] sm:$0xf]
    %v152 = vld [vmem:[#allocation2 + $0x1bc] sm:$0xf]
    %v153 = vld [vmem:[#allocation2 + $0x1c0] sm:$0xf]
    %v154 = vld [vmem:[#allocation2 + $0x1c4] sm:$0xf]
    %v155 = vld [vmem:[#allocation2 + $0x1c8] sm:$0xf]
    %v156 = vld [vmem:[#allocation2 + $0x1cc] sm:$0xf]
    %v157 = vld [vmem:[#allocation2 + $0x1d0] sm:$0xf]
    %v158 = vld [vmem:[#allocation2 + $0x1d4] sm:$0xf]
    %v159 = vld [vmem:[#allocation2 + $0x1d8] sm:$0xf]
    %v160 = vld [vmem:[#allocation2 + $0x1dc] sm:$0xf]
    %v161 = vld [vmem:[#allocation2 + $0x1e0] sm:$0xf]
    %v162 = vld [vmem:[#allocation2 + $0x1e4] sm:$0xf]
    %v163 = vld [vmem:[#allocation2 + $0x1e8] sm:$0xf]
    %v164 = vld [vmem:[#allocation2 + $0x1ec] sm:$0xf]
    %v165 = vld [vmem:[#allocation2 + $0x1f0] sm:$0xf]
    %v166 = vld [vmem:[#allocation2 + $0x1f4] sm:$0xf]
    %v167 = vld [vmem:[#allocation2 + $0x1f8] sm:$0xf]
    %v168 = vld [vmem:[#allocation2 + $0x1fc] sm:$0xf]
    %v169 = vld [vmem:[#allocation2 + $0x200] sm:$0xf]
    %v170 = vld [vmem:[#allocation2 + $0x204] sm:$0xf]
    %v171 = vld [vmem:[#allocation2 + $0x208] sm:$0xf]
    %v172 = vld [vmem:[#allocation2 + $0x20c] sm:$0xf]
    %v173 = vld [vmem:[#allocation2 + $0x210] sm:$0xf]
    %v174 = vld [vmem:[#allocation2 + $0x214] sm:$0xf]
    %v175 = vld [vmem:[#allocation2 + $0x218] sm:$0xf]
    %v176 = vld [vmem:[#allocation2 + $0x21c] sm:$0xf]
    %v177 = vld [vmem:[#allocation2 + $0x220] sm:$0xf]
    %v178 = vld [vmem:[#allocation2 + $0x224] sm:$0xf]
    %v179 = vld [vmem:[#allocation2 + $0x228] sm:$0xf]
    %v180 = vld [vmem:[#allocation2 + $0x22c] sm:$0xf]
    %v181 = vld [vmem:[#allocation2 + $0x230] sm:$0xf]
    %v182 = vld [vmem:[#allocation2 + $0x234] sm:$0xf]
    %v183 = vld [vmem:[#allocation2 + $0x238] sm:$0xf]
    %v184 = vld [vmem:[#allocation2 + $0x23c] sm:$0xf]
    %v185 = vld [vmem:[%s2] sm:$0x1]
    %v187 = vperm.slane %v185, 0
    %v194 = vunpack.c.l.b16 %v36
    %v195 = vunpack.c.h.b16 %v36
    %v196 = vunpack.c.l.b16 %v37
    %v197 = vunpack.c.h.b16 %v37
    %v198 = vunpack.c.l.b16 %v38
    %v199 = vunpack.c.h.b16 %v38
    %v200 = vunpack.c.l.b16 %v39
    %v201 = vunpack.c.h.b16 %v39
    %v202 = vunpack.c.l.b16 %v40
    %v203 = vpack.c.b16 %v194, %v194
    %v204 = vpack.c.b16 %v195, %v195
    %v205 = vpack.c.b16 %v196, %v196
    %v206 = vpack.c.b16 %v197, %v197
    %v207 = vpack.c.b16 %v198, %v198
    %v208 = vpack.c.b16 %v199, %v199
    %v209 = vpack.c.b16 %v200, %v200
    %v210 = vpack.c.b16 %v201, %v201
    %v211 = vpack.c.b16 %v202, %v202
    %v365 = vunpack.c.l.b16 %v41
    %v366 = vunpack.c.l.b16 %v42
    %v367 = vunpack.c.l.b16 %v43
    %v368 = vunpack.c.l.b16 %v44
    %v369 = vunpack.c.l.b16 %v45
    %v370 = vunpack.c.l.b16 %v46
    %v371 = vunpack.c.l.b16 %v47
    %v372 = vunpack.c.l.b16 %v48
    %v373 = vunpack.c.l.b16 %v49
    %v374 = vunpack.c.l.b16 %v50
    %v375 = vunpack.c.l.b16 %v51
    %v376 = vunpack.c.l.b16 %v52
    %v377 = vunpack.c.l.b16 %v53
    %v378 = vunpack.c.l.b16 %v54
    %v379 = vunpack.c.l.b16 %v55
    %v380 = vunpack.c.l.b16 %v56
    %v381 = vunpack.c.l.b16 %v57
    %v382 = vunpack.c.l.b16 %v58
    %v383 = vunpack.c.l.b16 %v59
    %v384 = vunpack.c.l.b16 %v60
    %v385 = vunpack.c.l.b16 %v61
    %v386 = vunpack.c.l.b16 %v62
    %v387 = vunpack.c.l.b16 %v63
    %v388 = vunpack.c.l.b16 %v64
    %v389 = vunpack.c.l.b16 %v65
    %v390 = vunpack.c.l.b16 %v66
    %v391 = vunpack.c.l.b16 %v67
    %v392 = vunpack.c.l.b16 %v68
    %v393 = vunpack.c.l.b16 %v69
    %v394 = vunpack.c.l.b16 %v70
    %v395 = vunpack.c.l.b16 %v71
    %v396 = vunpack.c.l.b16 %v72
    %v397 = vunpack.c.l.b16 %v73
    %v398 = vunpack.c.l.b16 %v74
    %v399 = vunpack.c.l.b16 %v75
    %v400 = vunpack.c.l.b16 %v76
    %v401 = vunpack.c.l.b16 %v77
    %v402 = vunpack.c.l.b16 %v78
    %v403 = vunpack.c.l.b16 %v79
    %v404 = vunpack.c.l.b16 %v80
    %v405 = vunpack.c.l.b16 %v81
    %v406 = vunpack.c.l.b16 %v82
    %v407 = vunpack.c.l.b16 %v83
    %v408 = vunpack.c.l.b16 %v84
    %v409 = vunpack.c.l.b16 %v85
    %v410 = vunpack.c.l.b16 %v86
    %v411 = vunpack.c.l.b16 %v87
    %v412 = vunpack.c.l.b16 %v88
    %v413 = vunpack.c.l.b16 %v89
    %v414 = vunpack.c.l.b16 %v90
    %v415 = vunpack.c.l.b16 %v91
    %v416 = vunpack.c.l.b16 %v92
    %v417 = vunpack.c.l.b16 %v93
    %v418 = vunpack.c.l.b16 %v94
    %v419 = vunpack.c.l.b16 %v95
    %v420 = vunpack.c.l.b16 %v96
    %v421 = vunpack.c.l.b16 %v97
    %v422 = vunpack.c.l.b16 %v98
    %v423 = vunpack.c.l.b16 %v99
    %v424 = vunpack.c.l.b16 %v100
    %v425 = vunpack.c.l.b16 %v101
    %v426 = vunpack.c.l.b16 %v102
    %v427 = vunpack.c.l.b16 %v103
    %v428 = vunpack.c.l.b16 %v104
    %v429 = vunpack.c.l.b16 %v105
    %v430 = vunpack.c.l.b16 %v106
    %v431 = vunpack.c.l.b16 %v107
    %v432 = vunpack.c.l.b16 %v108
    %v433 = vunpack.c.l.b16 %v109
    %v434 = vunpack.c.l.b16 %v110
    %v435 = vunpack.c.l.b16 %v111
    %v436 = vunpack.c.l.b16 %v112
    %v437 = vunpack.c.l.b16 %v113
    %v438 = vunpack.c.l.b16 %v114
    %v439 = vunpack.c.l.b16 %v115
    %v440 = vunpack.c.l.b16 %v116
    %v441 = vunpack.c.l.b16 %v117
    %v442 = vunpack.c.l.b16 %v118
    %v443 = vunpack.c.l.b16 %v119
    %v444 = vunpack.c.l.b16 %v120
    %v445 = vunpack.c.l.b16 %v121
    %v446 = vunpack.c.l.b16 %v122
    %v447 = vunpack.c.l.b16 %v123
    %v448 = vunpack.c.l.b16 %v124
    %v449 = vunpack.c.l.b16 %v125
    %v450 = vunpack.c.l.b16 %v126
    %v451 = vunpack.c.l.b16 %v127
    %v452 = vunpack.c.l.b16 %v128
    %v453 = vunpack.c.l.b16 %v129
    %v454 = vunpack.c.l.b16 %v130
    %v455 = vunpack.c.l.b16 %v131
    %v456 = vunpack.c.l.b16 %v132
    %v457 = vunpack.c.l.b16 %v133
    %v458 = vunpack.c.l.b16 %v134
    %v459 = vunpack.c.l.b16 %v135
    %v460 = vunpack.c.l.b16 %v136
    %v461 = vunpack.c.l.b16 %v137
    %v462 = vunpack.c.l.b16 %v138
    %v463 = vunpack.c.l.b16 %v139
    %v464 = vunpack.c.l.b16 %v140
    %v465 = vunpack.c.l.b16 %v141
    %v466 = vunpack.c.l.b16 %v142
    %v467 = vunpack.c.l.b16 %v143
    %v468 = vunpack.c.l.b16 %v144
    %v469 = vunpack.c.l.b16 %v145
    %v470 = vunpack.c.l.b16 %v146
    %v471 = vunpack.c.l.b16 %v147
    %v472 = vunpack.c.l.b16 %v148
    %v473 = vunpack.c.l.b16 %v149
    %v474 = vunpack.c.l.b16 %v150
    %v475 = vunpack.c.l.b16 %v151
    %v476 = vunpack.c.l.b16 %v152
    %v477 = vunpack.c.l.b16 %v153
    %v478 = vunpack.c.l.b16 %v154
    %v479 = vunpack.c.l.b16 %v155
    %v480 = vunpack.c.l.b16 %v156
    %v481 = vunpack.c.l.b16 %v157
    %v482 = vunpack.c.l.b16 %v158
    %v483 = vunpack.c.l.b16 %v159
    %v484 = vunpack.c.l.b16 %v160
    %v485 = vunpack.c.l.b16 %v161
    %v486 = vunpack.c.l.b16 %v162
    %v487 = vunpack.c.l.b16 %v163
    %v488 = vunpack.c.l.b16 %v164
    %v489 = vunpack.c.l.b16 %v165
    %v490 = vunpack.c.l.b16 %v166
    %v491 = vunpack.c.l.b16 %v167
    %v492 = vunpack.c.l.b16 %v168
    %v493 = vunpack.c.l.b16 %v169
    %v494 = vunpack.c.l.b16 %v170
    %v495 = vunpack.c.l.b16 %v171
    %v496 = vunpack.c.l.b16 %v172
    %v497 = vunpack.c.l.b16 %v173
    %v498 = vunpack.c.l.b16 %v174
    %v499 = vunpack.c.l.b16 %v175
    %v500 = vunpack.c.l.b16 %v176
    %v501 = vunpack.c.l.b16 %v177
    %v502 = vunpack.c.l.b16 %v178
    %v503 = vunpack.c.l.b16 %v179
    %v504 = vunpack.c.l.b16 %v180
    %v505 = vunpack.c.l.b16 %v181
    %v506 = vunpack.c.l.b16 %v182
    %v507 = vunpack.c.l.b16 %v183
    %v508 = vunpack.c.l.b16 %v184
    %v509 = vpack.c.b16 %v366, %v365
    %v510 = vpack.c.b16 %v368, %v367
    %v511 = vpack.c.b16 %v370, %v369
    %v512 = vpack.c.b16 %v372, %v371
    %v513 = vpack.c.b16 %v374, %v373
    %v514 = vpack.c.b16 %v376, %v375
    %v515 = vpack.c.b16 %v378, %v377
    %v516 = vpack.c.b16 %v380, %v379
    %v517 = vpack.c.b16 %v382, %v381
    %v518 = vpack.c.b16 %v384, %v383
    %v519 = vpack.c.b16 %v386, %v385
    %v520 = vpack.c.b16 %v388, %v387
    %v521 = vpack.c.b16 %v390, %v389
    %v522 = vpack.c.b16 %v392, %v391
    %v523 = vpack.c.b16 %v394, %v393
    %v524 = vpack.c.b16 %v396, %v395
    %v525 = vpack.c.b16 %v398, %v397
    %v526 = vpack.c.b16 %v400, %v399
    %v527 = vpack.c.b16 %v402, %v401
    %v528 = vpack.c.b16 %v404, %v403
    %v529 = vpack.c.b16 %v406, %v405
    %v530 = vpack.c.b16 %v408, %v407
    %v531 = vpack.c.b16 %v410, %v409
    %v532 = vpack.c.b16 %v412, %v411
    %v533 = vpack.c.b16 %v414, %v413
    %v534 = vpack.c.b16 %v416, %v415
    %v535 = vpack.c.b16 %v418, %v417
    %v536 = vpack.c.b16 %v420, %v419
    %v537 = vpack.c.b16 %v422, %v421
    %v538 = vpack.c.b16 %v424, %v423
    %v539 = vpack.c.b16 %v426, %v425
    %v540 = vpack.c.b16 %v428, %v427
    %v541 = vpack.c.b16 %v430, %v429
    %v542 = vpack.c.b16 %v432, %v431
    %v543 = vpack.c.b16 %v434, %v433
    %v544 = vpack.c.b16 %v436, %v435
    %v545 = vpack.c.b16 %v438, %v437
    %v546 = vpack.c.b16 %v440, %v439
    %v547 = vpack.c.b16 %v442, %v441
    %v548 = vpack.c.b16 %v444, %v443
    %v549 = vpack.c.b16 %v446, %v445
    %v550 = vpack.c.b16 %v448, %v447
    %v551 = vpack.c.b16 %v450, %v449
    %v552 = vpack.c.b16 %v452, %v451
    %v553 = vpack.c.b16 %v454, %v453
    %v554 = vpack.c.b16 %v456, %v455
    %v555 = vpack.c.b16 %v458, %v457
    %v556 = vpack.c.b16 %v460, %v459
    %v557 = vpack.c.b16 %v462, %v461
    %v558 = vpack.c.b16 %v464, %v463
    %v559 = vpack.c.b16 %v466, %v465
    %v560 = vpack.c.b16 %v468, %v467
    %v561 = vpack.c.b16 %v470, %v469
    %v562 = vpack.c.b16 %v472, %v471
    %v563 = vpack.c.b16 %v474, %v473
    %v564 = vpack.c.b16 %v476, %v475
    %v565 = vpack.c.b16 %v478, %v477
    %v566 = vpack.c.b16 %v480, %v479
    %v567 = vpack.c.b16 %v482, %v481
    %v568 = vpack.c.b16 %v484, %v483
    %v569 = vpack.c.b16 %v486, %v485
    %v570 = vpack.c.b16 %v488, %v487
    %v571 = vpack.c.b16 %v490, %v489
    %v572 = vpack.c.b16 %v492, %v491
    %v573 = vpack.c.b16 %v494, %v493
    %v574 = vpack.c.b16 %v496, %v495
    %v575 = vpack.c.b16 %v498, %v497
    %v576 = vpack.c.b16 %v500, %v499
    %v577 = vpack.c.b16 %v502, %v501
    %v578 = vpack.c.b16 %v504, %v503
    %v579 = vpack.c.b16 %v506, %v505
    %v580 = vpack.c.b16 %v508, %v507
    %653 = vmatpush.bf16.msra.mxu0 %v516
    %654 = vmatpush.bf16.msra.mxu0 %v515
    %655 = vmatpush.bf16.msra.mxu0 %v514
    %656 = vmatpush.bf16.msra.mxu0 %v513
    %657 = vmatpush.bf16.msra.mxu0 %v512
    %658 = vmatpush.bf16.msra.mxu0 %v511
    %659 = vmatpush.bf16.msra.mxu0 %v510
    %660 = vmatpush.bf16.msra.mxu0 %v509
    %661 = vmatmul.bf16.gmra.mxu0 %v203
    %v662 = vpop.f32.mrf.mxu0
    %v663 = vadd.f32 %v187, %v662
    %v664 = vpop.f32.mrf.mxu0
    %665 = vdwg.mxu0
    %666 = vmatpush.bf16.msra.mxu0 %v524
    %667 = vmatpush.bf16.msra.mxu0 %v523
    %668 = vmatpush.bf16.msra.mxu0 %v522
    %669 = vmatpush.bf16.msra.mxu0 %v521
    %670 = vmatpush.bf16.msra.mxu0 %v520
    %671 = vmatpush.bf16.msra.mxu0 %v519
    %672 = vmatpush.bf16.msra.mxu0 %v518
    %673 = vmatpush.bf16.msra.mxu0 %v517
    %674 = vmatmul.bf16.gmra.mxu0 %v204
    %v675 = vpop.f32.mrf.mxu0
    %v676 = vadd.f32 %v663, %v675
    %v677 = vpop.f32.mrf.mxu0
    %678 = vdwg.mxu0
    %679 = vmatpush.bf16.msra.mxu0 %v532
    %680 = vmatpush.bf16.msra.mxu0 %v531
    %681 = vmatpush.bf16.msra.mxu0 %v530
    %682 = vmatpush.bf16.msra.mxu0 %v529
    %683 = vmatpush.bf16.msra.mxu0 %v528
    %684 = vmatpush.bf16.msra.mxu0 %v527
    %685 = vmatpush.bf16.msra.mxu0 %v526
    %686 = vmatpush.bf16.msra.mxu0 %v525
    %687 = vmatmul.bf16.gmra.mxu0 %v205
    %v688 = vpop.f32.mrf.mxu0
    %v689 = vadd.f32 %v676, %v688
    %v690 = vpop.f32.mrf.mxu0
    %691 = vdwg.mxu0
    %692 = vmatpush.bf16.msra.mxu0 %v540
    %693 = vmatpush.bf16.msra.mxu0 %v539
    %694 = vmatpush.bf16.msra.mxu0 %v538
    %695 = vmatpush.bf16.msra.mxu0 %v537
    %696 = vmatpush.bf16.msra.mxu0 %v536
    %697 = vmatpush.bf16.msra.mxu0 %v535
    %698 = vmatpush.bf16.msra.mxu0 %v534
    %699 = vmatpush.bf16.msra.mxu0 %v533
    %700 = vmatmul.bf16.gmra.mxu0 %v206
    %v701 = vpop.f32.mrf.mxu0
    %v702 = vadd.f32 %v689, %v701
    %v703 = vpop.f32.mrf.mxu0
    %704 = vdwg.mxu0
    %705 = vmatpush.bf16.msra.mxu0 %v548
    %706 = vmatpush.bf16.msra.mxu0 %v547
    %707 = vmatpush.bf16.msra.mxu0 %v546
    %708 = vmatpush.bf16.msra.mxu0 %v545
    %709 = vmatpush.bf16.msra.mxu0 %v544
    %710 = vmatpush.bf16.msra.mxu0 %v543
    %711 = vmatpush.bf16.msra.mxu0 %v542
    %712 = vmatpush.bf16.msra.mxu0 %v541
    %713 = vmatmul.bf16.gmra.mxu0 %v207
    %v714 = vpop.f32.mrf.mxu0
    %v715 = vadd.f32 %v702, %v714
    %v716 = vpop.f32.mrf.mxu0
    %717 = vdwg.mxu0
    %718 = vmatpush.bf16.msra.mxu0 %v556
    %719 = vmatpush.bf16.msra.mxu0 %v555
    %720 = vmatpush.bf16.msra.mxu0 %v554
    %721 = vmatpush.bf16.msra.mxu0 %v553
    %722 = vmatpush.bf16.msra.mxu0 %v552
    %723 = vmatpush.bf16.msra.mxu0 %v551
    %724 = vmatpush.bf16.msra.mxu0 %v550
    %725 = vmatpush.bf16.msra.mxu0 %v549
    %726 = vmatmul.bf16.gmra.mxu0 %v208
    %v727 = vpop.f32.mrf.mxu0
    %v728 = vadd.f32 %v715, %v727
    %v729 = vpop.f32.mrf.mxu0
    %730 = vdwg.mxu0
    %731 = vmatpush.bf16.msra.mxu0 %v564
    %732 = vmatpush.bf16.msra.mxu0 %v563
    %733 = vmatpush.bf16.msra.mxu0 %v562
    %734 = vmatpush.bf16.msra.mxu0 %v561
    %735 = vmatpush.bf16.msra.mxu0 %v560
    %736 = vmatpush.bf16.msra.mxu0 %v559
    %737 = vmatpush.bf16.msra.mxu0 %v558
    %738 = vmatpush.bf16.msra.mxu0 %v557
    %739 = vmatmul.bf16.gmra.mxu0 %v209
    %v740 = vpop.f32.mrf.mxu0
    %v741 = vadd.f32 %v728, %v740
    %v742 = vpop.f32.mrf.mxu0
    %743 = vdwg.mxu0
    %744 = vmatpush.bf16.msra.mxu0 %v572
    %745 = vmatpush.bf16.msra.mxu0 %v571
    %746 = vmatpush.bf16.msra.mxu0 %v570
    %747 = vmatpush.bf16.msra.mxu0 %v569
    %748 = vmatpush.bf16.msra.mxu0 %v568
    %749 = vmatpush.bf16.msra.mxu0 %v567
    %750 = vmatpush.bf16.msra.mxu0 %v566
    %751 = vmatpush.bf16.msra.mxu0 %v565
    %752 = vmatmul.bf16.gmra.mxu0 %v210
    %v753 = vpop.f32.mrf.mxu0
    %v754 = vadd.f32 %v741, %v753
    %v755 = vpop.f32.mrf.mxu0
    %756 = vdwg.mxu0
    %757 = vmatpush.bf16.msra.mxu0 %v580
    %758 = vmatpush.bf16.msra.mxu0 %v579
    %759 = vmatpush.bf16.msra.mxu0 %v578
    %760 = vmatpush.bf16.msra.mxu0 %v577
    %761 = vmatpush.bf16.msra.mxu0 %v576
    %762 = vmatpush.bf16.msra.mxu0 %v575
    %763 = vmatpush.bf16.msra.mxu0 %v574
    %764 = vmatpush.bf16.msra.mxu0 %v573
    %765 = vmatmul.bf16.gmra.mxu0 %v211
    %v766 = vpop.f32.mrf.mxu0
    %v767 = vadd.f32 %v754, %v766
    %v768 = vpop.f32.mrf.mxu0
    %769 = vdwg.mxu0
    %v770 = vmax.f32 %v767, 0.0
    %v771 = vpack.c.bf16 %v770, %v770
    %v772 = vld [vmem:[%s3] sm:$0xf]
    %v773 = vld [vmem:[%s3 + $0x4] sm:$0xf]
    %v774 = vld [vmem:[%s3 + $0x8] sm:$0xf]
    %v775 = vld [vmem:[%s3 + $0xc] sm:$0xf]
    %v776 = vld [vmem:[%s3 + $0x10] sm:$0xf]
    %v777 = vld [vmem:[%s3 + $0x14] sm:$0xf]
    %v778 = vld [vmem:[%s3 + $0x18] sm:$0xf]
    %v779 = vld [vmem:[%s3 + $0x1c] sm:$0xf]
    %v780 = vld [vmem:[%s3 + $0x20] sm:$0xf]
    %v781 = vld [vmem:[%s3 + $0x24] sm:$0xf]
    %v782 = vld [vmem:[%s3 + $0x28] sm:$0xf]
    %v783 = vld [vmem:[%s3 + $0x2c] sm:$0xf]
    %v784 = vld [vmem:[%s3 + $0x30] sm:$0xf]
    %v785 = vld [vmem:[%s3 + $0x34] sm:$0xf]
    %v786 = vld [vmem:[%s3 + $0x38] sm:$0xf]
    %v787 = vld [vmem:[%s3 + $0x3c] sm:$0xf]
    %v788 = vld [vmem:[%s4] sm:$0x1]
    %v790 = vperm.slane %v788, 0
    %v808 = vunpack.c.l.b16 %v772
    %v809 = vunpack.c.l.b16 %v773
    %v810 = vunpack.c.l.b16 %v774
    %v811 = vunpack.c.l.b16 %v775
    %v812 = vunpack.c.l.b16 %v776
    %v813 = vunpack.c.l.b16 %v777
    %v814 = vunpack.c.l.b16 %v778
    %v815 = vunpack.c.l.b16 %v779
    %v816 = vunpack.c.l.b16 %v780
    %v817 = vunpack.c.l.b16 %v781
    %v818 = vunpack.c.l.b16 %v782
    %v819 = vunpack.c.l.b16 %v783
    %v820 = vunpack.c.l.b16 %v784
    %v821 = vunpack.c.l.b16 %v785
    %v822 = vunpack.c.l.b16 %v786
    %v823 = vunpack.c.l.b16 %v787
    %v824 = vpack.c.b16 %v809, %v808
    %v825 = vpack.c.b16 %v811, %v810
    %v826 = vpack.c.b16 %v813, %v812
    %v827 = vpack.c.b16 %v815, %v814
    %v828 = vpack.c.b16 %v817, %v816
    %v829 = vpack.c.b16 %v819, %v818
    %v830 = vpack.c.b16 %v821, %v820
    %v831 = vpack.c.b16 %v823, %v822
    %840 = vmatpush.bf16.msra.mxu0 %v831
    %841 = vmatpush.bf16.msra.mxu0 %v830
    %842 = vmatpush.bf16.msra.mxu0 %v829
    %843 = vmatpush.bf16.msra.mxu0 %v828
    %844 = vmatpush.bf16.msra.mxu0 %v827
    %845 = vmatpush.bf16.msra.mxu0 %v826
    %846 = vmatpush.bf16.msra.mxu0 %v825
    %847 = vmatpush.bf16.msra.mxu0 %v824
    %848 = vmatmul.bf16.gmra.mxu0 %v771
    %v849 = vpop.f32.mrf.mxu0
    %v850 = vadd.f32 %v790, %v849
    %v851 = vpop.f32.mrf.mxu0
    %852 = vdwg.mxu0
    %853 = vst [vmem:[%s5] sm:$0xff] %v850
    // Predicated region
    $region26: #{_agent_forward.1} parent=1 // pred_check
      _
    $region27: #{_agent_forward.1} parent=1 // pred_check_branch
      %855 = sbr.rel (0) target = $region29
    $region28: #{_agent_forward.1} parent=1 // pred_region
      _
    $region29: #{_agent_forward.1} parent=1 // pred_fallthru
      _
    // Predicated region
    $region30: #{_agent_forward.1} parent=1 // pred_check
      _
    $region31: #{_agent_forward.1} parent=1 // pred_check_branch
      %857 = sbr.rel (0) target = $region33
    $region32: #{_agent_forward.1} parent=1 // pred_region
      _
    $region33: #{_agent_forward.1} parent=1 // pred_fallthru
      _
    %858 = vsyncpa [#allocation3], 1

</llo_original>
